<compile_context>
chip_gen: v7x
topology: tpu7x:2x2x1
jax: 0.10.0
libtpu: 0.0.40
codegen_flags: <defaults>
</compile_context>

<pallas_src>
import jax
import jax.numpy as jnp
from jax import lax
from jax.experimental import pallas as pl
from jax.experimental.pallas import tpu as pltpu

WIDTH = 32


def _num_tensorcores() -> int:
    """Best-effort TensorCores-per-device (v7x = 2). Safe default: 1."""
    try:
        return max(1, int(getattr(jax.devices()[0], "num_cores", 1) or 1))
    except Exception:
        return 1


def _make_kernel(num_chunks: int, chunk: int, feat_dtype):
    def rbf_kernel(x_ref, a_ref, nia2_ref, bt_ref, o_ref):
        # x_ref:    (1, tm)          point tile, lane-major
        # a_ref:    (WIDTH, 1)       RBF centers (broadcast over lanes)
        # nia2_ref: (WIDTH, 1)       precomputed -1/A^2
        # bt_ref:   (C_pad, WIDTH)   B^T, zero-padded rows
        # o_ref:    (C_pad, tm)      lane-dense output tile
        a = a_ref[...]
        nia2 = nia2_ref[...]
        bt = bt_ref[...]

        def compute(xc):
            diff = xc - a                          # (WIDTH, chunk) broadcast
            z = diff * diff * nia2                 # VALU
            feat = jnp.exp(z.astype(feat_dtype))   # EUP, lane-dense
            return jnp.dot(
                bt, feat, preferred_element_type=jnp.float32
            ).astype(o_ref.dtype)

        if num_chunks == 1:
            o_ref[...] = compute(x_ref[...])
        else:
            def body(c, carry):
                off = pl.multiple_of(c * chunk, chunk)
                o_ref[:, pl.ds(off, chunk)] = compute(x_ref[:, pl.ds(off, chunk)])
                return carry

            lax.fori_loop(0, num_chunks, body, 0,
                          unroll=min(num_chunks, 16))

    return rbf_kernel


def per_point_rbf_lane_major(x, a, A, B, *, tm=32768,
                             feat_dtype=jnp.float32,
                             out_dtype=jnp.float32):
    """Fast path: returns the raw (C_pad, N_pad) lane-major output slab
    (rows [classes:] are zero padding, columns [N:] are padding points).
    Consumers that can use this layout avoid a second full-output HBM pass."""
    N = x.shape[0]
    classes = B.shape[1]
    C_pad = max(8, ((classes + 7) // 8) * 8)

    # Tile size: multiple of 128 (lane width), capped at the padded problem.
    N128 = ((N + 127) // 128) * 128
    tm = max(128, min((tm // 128) * 128, N128))

    # Only split the tile for chips with >= 2 TensorCores (v7x); on v5e/v6e
    # a single maximal tile per grid step is strictly better (fewer serial
    # 0.35 us grid steps).  When splitting, aim for an even tile count so
    # both cores get balanced work.
    if _num_tensorcores() >= 2 and N128 >= 256:
        tiles = max(2, 2 * ((N128 + 2 * tm - 1) // (2 * tm)))
        tm = max(128, (((N128 + tiles - 1) // tiles) + 127) // 128 * 128)

    N_pad = ((N + tm - 1) // tm) * tm
    grid = (N_pad // tm,)

    # In-kernel strip-mining chunk (lane dimension).  512 lanes keeps feat at
    # <= 16 f32 vregs; fall back to smaller divisors for ragged tiles.
    if tm <= 512:
        chunk = tm
    elif tm % 512 == 0:
        chunk = 512
    elif tm % 256 == 0:
        chunk = 256
    else:
        chunk = 128
    num_chunks = tm // chunk

    # Lane-major / precomputed layouts (one-time, tiny host-side work).
    x2 = jnp.pad(x.astype(jnp.float32), (0, N_pad - N)).reshape(1, N_pad)
    a2 = a.astype(jnp.float32).reshape(WIDTH, 1)
    nia2 = (-1.0 / (A.astype(jnp.float32) ** 2)).reshape(WIDTH, 1)
    bt = jnp.zeros((C_pad, WIDTH), feat_dtype).at[:classes].set(
        B.T.astype(feat_dtype))                       # (C_pad, WIDTH)

    out_t = pl.pallas_call(
        _make_kernel(num_chunks, chunk, feat_dtype),
        out_shape=jax.ShapeDtypeStruct((C_pad, N_pad), out_dtype),
        grid_spec=pltpu.PrefetchScalarGridSpec(
            num_scalar_prefetch=0,
            grid=grid,
            in_specs=[
                pl.BlockSpec((1, tm), lambda i: (0, i)),
                pl.BlockSpec((WIDTH, 1), lambda i: (0, 0)),
                pl.BlockSpec((WIDTH, 1), lambda i: (0, 0)),
                pl.BlockSpec((C_pad, WIDTH), lambda i: (0, 0)),
            ],
            out_specs=pl.BlockSpec((C_pad, tm), lambda i: (0, i)),
        ),
        compiler_params=pltpu.CompilerParams(
            dimension_semantics=("parallel",)
        ),
        cost_estimate=pl.CostEstimate(
            flops=2 * N_pad * WIDTH * C_pad,
            transcendentals=N_pad * WIDTH,
            bytes_accessed=(4 * N_pad + 2 * 4 * WIDTH
                            + int(bt.dtype.itemsize) * C_pad * WIDTH
                            + jnp.dtype(out_dtype).itemsize * C_pad * N_pad),
        ),
    )(x2, a2, nia2, bt)
    return out_t


def per_point_rbf(x, a, A, B, *, tm=32768):
    """Module-contract layout: (N, classes) float32.

    Uses the lane-major kernel and restores (N, classes) with one
    slice+transpose; downstream code that can consume the (classes, N)
    lane-major slab should call per_point_rbf_lane_major directly and skip
    this extra output pass entirely.
    """
    N = x.shape[0]
    classes = B.shape[1]
    out_t = per_point_rbf_lane_major(x, a, A, B, tm=tm)
    return out_t[:classes, :N].T


def _reference(x, a, A, B):
    feat = jnp.exp(-((x[:, None] - a[None, :]) ** 2) / (A[None, :] ** 2))
    return feat @ B


if __name__ == "__main__":
    key = jax.random.PRNGKey(0)
    k_x, k_a, k_b = jax.random.split(key, 3)

    classes = 10

    # Deterministic parameter init mirroring the module's __init__ shapes,
    # but with a non-zero B so the matmul path is actually validated.
    A = jnp.full((WIDTH,), 0.1, dtype=jnp.float32)
    a = 5.0 * jax.random.normal(k_a, (WIDTH,), dtype=jnp.float32)
    B = 0.1 * jax.random.normal(k_b, (WIDTH, classes), dtype=jnp.float32)

    ok = True
    # 256: single-chunk path; 200: ragged-N padding; 1600: strip-mined
    # multi-chunk fori_loop path (13 chunks of 128 lanes).
    for N in (256, 200, 1600):
        x = jax.random.normal(k_x, (N,), dtype=jnp.float32)
        out = jax.block_until_ready(per_point_rbf(x, a, A, B))
        ref = _reference(x, a, A, B)
        ok = ok and (out.shape == (N, classes))
        ok = ok and bool(jnp.allclose(out, ref, atol=1e-4, rtol=1e-4))

    assert ok, "mismatch vs reference"
    print("KERNEL_OK")
</pallas_src>

<mosaic_0001>
module attributes {stable_mosaic.version = 11 : i64} {
  func.func @rbf_kernel(%arg0: i32, %arg1: memref<1x256xf32, #tpu.memory_space<vmem>>, %arg2: memref<32x1xf32, #tpu.memory_space<vmem>>, %arg3: memref<32x1xf32, #tpu.memory_space<vmem>>, %arg4: memref<16x32xf32, #tpu.memory_space<vmem>>, %arg5: memref<16x256xf32, #tpu.memory_space<vmem>>) attributes {dimension_semantics = [#tpu.dimension_semantics<parallel>], iteration_bounds = array<i64: 1>, scalar_prefetch = 0 : i64, scratch_operands = 0 : i64, tpu.core_type = #tpu.core_type<tc>, window_params = [{transform_indices = @transform_0, window_bounds = array<i64: 1, 256>}, {pipeline_mode = #tpu.pipeline_mode<synchronous>, transform_indices = @transform_1, window_bounds = array<i64: 32, 1>}, {pipeline_mode = #tpu.pipeline_mode<synchronous>, transform_indices = @transform_2, window_bounds = array<i64: 32, 1>}, {pipeline_mode = #tpu.pipeline_mode<synchronous>, transform_indices = @transform_3, window_bounds = array<i64: 16, 32>}, {transform_indices = @transform_4, window_bounds = array<i64: 16, 256>}]} {
    %c0 = arith.constant 0 : index
    %c0_0 = arith.constant 0 : index
    %0 = vector.load %arg2[%c0, %c0_0] : memref<32x1xf32, #tpu.memory_space<vmem>>, vector<32x1xf32>
    %c0_1 = arith.constant 0 : index
    %c0_2 = arith.constant 0 : index
    %1 = vector.load %arg3[%c0_1, %c0_2] : memref<32x1xf32, #tpu.memory_space<vmem>>, vector<32x1xf32>
    %c0_3 = arith.constant 0 : index
    %c0_4 = arith.constant 0 : index
    %2 = vector.load %arg4[%c0_3, %c0_4] : memref<16x32xf32, #tpu.memory_space<vmem>>, vector<16x32xf32>
    %c0_5 = arith.constant 0 : index
    %c0_6 = arith.constant 0 : index
    %3 = vector.load %arg1[%c0_5, %c0_6] : memref<1x256xf32, #tpu.memory_space<vmem>>, vector<1x256xf32>
    %4 = vector.broadcast %3 : vector<1x256xf32> to vector<32x256xf32>
    %5 = vector.broadcast %0 : vector<32x1xf32> to vector<32x256xf32>
    %6 = arith.subf %4, %5 : vector<32x256xf32>
    %7 = arith.mulf %6, %6 : vector<32x256xf32>
    %8 = vector.broadcast %1 : vector<32x1xf32> to vector<32x256xf32>
    %9 = arith.mulf %7, %8 : vector<32x256xf32>
    %10 = math.exp %9 : vector<32x256xf32>
    %cst = arith.constant dense<0.000000e+00> : vector<16x256xf32>
    %11 = tpu.matmul %2, %10, %cst {dimension_numbers = #tpu.dot_dimension_numbers<[1], [0], [0], [1], [0, 0, 1, 1], [], []>} : vector<16x32xf32>, vector<32x256xf32>, vector<16x256xf32> -> vector<16x256xf32>
    %c0_7 = arith.constant 0 : index
    %c0_8 = arith.constant 0 : index
    %12 = vector.load %arg5[%c0_7, %c0_8] : memref<16x256xf32, #tpu.memory_space<vmem>>, vector<16x256xf32>
    tpu.vector_store %arg5[%c0_7, %c0_8], %11 {strides = array<i32>} : memref<16x256xf32, #tpu.memory_space<vmem>>, vector<16x256xf32>,
    return
  }
  func.func @transform_0(%arg0: i32) -> (i32, i32) {
    %c0_i32 = arith.constant 0 : i32
    %c0_i32_0 = arith.constant 0 : i32
    return %c0_i32, %arg0 : i32, i32
  }
  func.func @transform_1(%arg0: i32) -> (i32, i32) {
    %c0_i32 = arith.constant 0 : i32
    %c0_i32_0 = arith.constant 0 : i32
    %c0_i32_1 = arith.constant 0 : i32
    return %c0_i32, %c0_i32_0 : i32, i32
  }
  func.func @transform_2(%arg0: i32) -> (i32, i32) {
    %c0_i32 = arith.constant 0 : i32
    %c0_i32_0 = arith.constant 0 : i32
    %c0_i32_1 = arith.constant 0 : i32
    return %c0_i32, %c0_i32_0 : i32, i32
  }
  func.func @transform_3(%arg0: i32) -> (i32, i32) {
    %c0_i32 = arith.constant 0 : i32
    %c0_i32_0 = arith.constant 0 : i32
    %c0_i32_1 = arith.constant 0 : i32
    return %c0_i32, %c0_i32_0 : i32, i32
  }
  func.func @transform_4(%arg0: i32) -> (i32, i32) {
    %c0_i32 = arith.constant 0 : i32
    %c0_i32_0 = arith.constant 0 : i32
    return %c0_i32, %arg0 : i32, i32
  }
}

</mosaic_0001>

<llo_original>
// kernel: tpu_custom_call.1
$region0: #{tpu_custom_call.1}
  #allocation0 [shape = 'u32[]', space=smem, size = 0x4, offset = 0x4, fixed_abs, tag = 'smem constant byte address 0x4 - core index']
  #allocation1 [shape = 'u32[144,128]{1,0:T(1,128)}', space=vmem, size = 0x12000, scoped, tag = 'internal scratch']
  %s0 = inlined_call_operand.vmem [shape: f32[1,256], index: 0, kind: input, shape index: {}]
  %s1 = inlined_call_operand.vmem [shape: f32[32,1], index: 1, kind: input, shape index: {}]
  %s2 = inlined_call_operand.vmem [shape: f32[32,1], index: 2, kind: input, shape index: {}]
  %s3 = inlined_call_operand.vmem [shape: f32[16,32], index: 3, kind: input, shape index: {}]
  %s4 = inlined_call_operand.hbm [shape: f32[16,256], index: 4, kind: output, shape index: {}]
  %s5 = sld [smem:[#allocation0]]
  $region26: #{tpu_custom_call.1} parent=0
    _
  %s7 = ssub.s32 1, %s5
  %s8 = scalar_select 0, %s7, %s5
  $region1: #{tpu_custom_call.1} parent=0
    #allocation2 [shape = 'u8[16384]{0}', space=vmem, size = 0x4000, scoped, tag = 'output window, operand 0, single buffered']
    #allocation3 [shape = 's32[1]{0}', space=sflag, size = 0x4, scoped, tag = 'scoped memory for tpu_custom_call.1']
    %9 = vsyncpa [#allocation3], 0
    // Predicated region
    $region2: #{tpu_custom_call.1} parent=1 // pred_check
      _
    $region3: #{tpu_custom_call.1} parent=1 // pred_check_branch
      %11 = sbr.rel (0) target = $region5
    $region4: #{tpu_custom_call.1} parent=1 // pred_region
      _
    $region5: #{tpu_custom_call.1} parent=1 // pred_fallthru
      _
    // Predicated region
    $region6: #{tpu_custom_call.1} parent=1 // pred_check
      _
    $region7: #{tpu_custom_call.1} parent=1 // pred_check_branch
      %13 = sbr.rel (0) target = $region9
    $region8: #{tpu_custom_call.1} parent=1 // pred_region
      _
    $region9: #{tpu_custom_call.1} parent=1 // pred_fallthru
      _
    // Predicated region
    $region10: #{tpu_custom_call.1} parent=1 // pred_check
      _
    $region11: #{tpu_custom_call.1} parent=1 // pred_check_branch
      %15 = sbr.rel (0) target = $region13
    $region12: #{tpu_custom_call.1} parent=1 // pred_region
      _
    $region13: #{tpu_custom_call.1} parent=1 // pred_fallthru
      _
    // Predicated region
    $region14: #{tpu_custom_call.1} parent=1 // pred_check
      _
    $region15: #{tpu_custom_call.1} parent=1 // pred_check_branch
      %17 = sbr.rel (0) target = $region17
    $region16: #{tpu_custom_call.1} parent=1 // pred_region
      _
    $region17: #{tpu_custom_call.1} parent=1 // pred_fallthru
      _
    %v18 = vld [vmem:[%s1] sm:$0xff]
    %v19 = vld [vmem:[%s1 + $0x8] sm:$0xff]
    %v20 = vld [vmem:[%s1 + $0x10] sm:$0xff]
    %v21 = vld [vmem:[%s1 + $0x18] sm:$0xff]
    %v22 = vld [vmem:[%s2] sm:$0xff]
    %v23 = vld [vmem:[%s2 + $0x8] sm:$0xff]
    %v24 = vld [vmem:[%s2 + $0x10] sm:$0xff]
    %v25 = vld [vmem:[%s2 + $0x18] sm:$0xff]
    %v26 = vld [vmem:[%s3] sm:$0xff]
    %v27 = vld [vmem:[%s3 + $0x8] sm:$0xff]
    %v28 = vld [vmem:[%s0] sm:$0x3]
    %v30 = vlaneseq
    %v31 = vshrl.u32 %v30, 7
    %v32 = vsub.s32 0, %v31
    %v33 = vrot.slane %v28, %v32
    %v34 = vlaneseq
    %v35 = vshrl.u32 %v34, 7
    %v36 = vsub.s32 1, %v35
    %v37 = vrot.slane %v28, %v36
    %41 = vset.pattern.permute.xlu0 0
    %42 = vperm.xlu0 %41, %v18
    %v43 = vpop.permute.xlu0 %42
    %46 = vset.pattern.permute.xlu0 0
    %47 = vperm.xlu0 %46, %v19
    %v48 = vpop.permute.xlu0 %47
    %51 = vset.pattern.permute.xlu0 0
    %52 = vperm.xlu0 %51, %v20
    %v53 = vpop.permute.xlu0 %52
    %56 = vset.pattern.permute.xlu0 0
    %57 = vperm.xlu0 %56, %v21
    %v58 = vpop.permute.xlu0 %57
    %v60 = vsub.f32 %v33, %v43
    %v61 = vsub.f32 %v37, %v43
    %v62 = vsub.f32 %v33, %v48
    %v63 = vsub.f32 %v37, %v48
    %v64 = vsub.f32 %v33, %v53
    %v65 = vsub.f32 %v37, %v53
    %v66 = vsub.f32 %v33, %v58
    %v67 = vsub.f32 %v37, %v58
    %v68 = vmul.f32 %v60, %v60
    %v69 = vmul.f32 %v61, %v61
    %v70 = vmul.f32 %v62, %v62
    %v71 = vmul.f32 %v63, %v63
    %v72 = vmul.f32 %v64, %v64
    %v73 = vmul.f32 %v65, %v65
    %v74 = vmul.f32 %v66, %v66
    %v75 = vmul.f32 %v67, %v67
    %77 = vset.pattern.permute.xlu0 0
    %78 = vperm.xlu0 %77, %v22
    %v79 = vpop.permute.xlu0 %78
    %82 = vset.pattern.permute.xlu0 0
    %83 = vperm.xlu0 %82, %v23
    %v84 = vpop.permute.xlu0 %83
    %87 = vset.pattern.permute.xlu0 0
    %88 = vperm.xlu0 %87, %v24
    %v89 = vpop.permute.xlu0 %88
    %92 = vset.pattern.permute.xlu0 0
    %93 = vperm.xlu0 %92, %v25
    %v94 = vpop.permute.xlu0 %93
    %v96 = vmul.f32 %v68, %v79
    %v97 = vmul.f32 %v69, %v79
    %v98 = vmul.f32 %v70, %v84
    %v99 = vmul.f32 %v71, %v84
    %v100 = vmul.f32 %v72, %v89
    %v101 = vmul.f32 %v73, %v89
    %v102 = vmul.f32 %v74, %v94
    %v103 = vmul.f32 %v75, %v94
    %v104 = vmul.f32 %v96, 1.442695
    %v105 = vpow.pop %v104
    %v106 = vmul.f32 %v97, 1.442695
    %v107 = vpow.pop %v106
    %v108 = vmul.f32 %v98, 1.442695
    %v109 = vpow.pop %v108
    %v110 = vmul.f32 %v99, 1.442695
    %v111 = vpow.pop %v110
    %v112 = vmul.f32 %v100, 1.442695
    %v113 = vpow.pop %v112
    %v114 = vmul.f32 %v101, 1.442695
    %v115 = vpow.pop %v114
    %v116 = vmul.f32 %v102, 1.442695
    %v117 = vpow.pop %v116
    %v118 = vmul.f32 %v103, 1.442695
    %v119 = vpow.pop %v118
    %vm120 = vcmask 261120
    %v122 = vsel %vm120, %v26, 0
    %v125 = vsel %vm120, %v27, 0
    %127 = vmatprep.subr.mxu0 %v107
    %128 = vmatpush1.msra.mxu0 %v105
    %129 = vmatprep.subr.mxu0 %v111
    %130 = vmatpush1.msra.mxu0 %v109
    %131 = vmatprep.subr.mxu0 %v115
    %132 = vmatpush1.msra.mxu0 %v113
    %133 = vmatprep.subr.mxu0 %v119
    %134 = vmatpush1.msra.mxu0 %v117
    %135 = vmatprep.subr.mxu0 0.0
    %136 = vmatpush1.msra.mxu0 0.0
    %137 = vmatprep.subr.mxu0 0.0
    %138 = vmatpush1.msra.mxu0 0.0
    %139 = vmatprep.subr.mxu0 0.0
    %140 = vmatpush1.msra.mxu0 0.0
    %141 = vmatprep.subr.mxu0 0.0
    %142 = vmatpush1.msra.mxu0 0.0
    %143 = vmatprep.subr.mxu0 0.0
    %144 = vmatpush1.msra.mxu0 0.0
    %145 = vmatprep.subr.mxu0 0.0
    %146 = vmatpush1.msra.mxu0 0.0
    %147 = vmatprep.subr.mxu0 0.0
    %148 = vmatpush1.msra.mxu0 0.0
    %149 = vmatprep.subr.mxu0 0.0
    %150 = vmatpush1.msra.mxu0 0.0
    %151 = vmatprep.subr.mxu0 0.0
    %152 = vmatpush1.msra.mxu0 0.0
    %153 = vmatprep.subr.mxu0 0.0
    %154 = vmatpush1.msra.mxu0 0.0
    %155 = vmatprep.subr.mxu0 0.0
    %156 = vmatpush1.msra.mxu0 0.0
    %157 = vmatprep.subr.mxu0 0.0
    %158 = vmatpush1.msra.mxu0 0.0
    %159 = vmatprep.subr.mxu0 0.0
    %160 = vmatpush1.msra.mxu0 0.0
    %161 = vmatprep.subr.mxu0 0.0
    %162 = vmatpush1.msra.mxu0 0.0
    %163 = vmatprep.subr.mxu0 0.0
    %164 = vmatpush1.msra.mxu0 0.0
    %165 = vmatprep.subr.mxu0 0.0
    %166 = vmatpush1.msra.mxu0 0.0
    %167 = vmatprep.subr.mxu0 0.0
    %168 = vmatpush1.msra.mxu0 0.0
    %169 = vmatprep.subr.mxu0 0.0
    %170 = vmatpush1.msra.mxu0 0.0
    %171 = vmatprep.subr.mxu0 0.0
    %172 = vmatpush1.msra.mxu0 0.0
    %173 = vmatprep.subr.mxu0 0.0
    %174 = vmatpush1.msra.mxu0 0.0
    %175 = vmatprep.subr.mxu0 0.0
    %176 = vmatpush1.msra.mxu0 0.0
    %177 = vmatprep.subr.mxu0 0.0
    %178 = vmatpush1.msra.mxu0 0.0
    %179 = vmatprep.subr.mxu0 0.0
    %180 = vmatpush1.msra.mxu0 0.0
    %181 = vmatprep.subr.mxu0 0.0
    %182 = vmatpush1.msra.mxu0 0.0
    %183 = vmatprep.subr.mxu0 0.0
    %184 = vmatpush1.msra.mxu0 0.0
    %185 = vmatprep.subr.mxu0 0.0
    %186 = vmatpush1.msra.mxu0 0.0
    %187 = vmatprep.subr.mxu0 0.0
    %188 = vmatpush1.msra.mxu0 0.0
    %189 = vmatprep.subr.mxu0 0.0
    %190 = vmatpush1.msra.mxu0 0.0
    %191 = vmatprep.mubr.f32.mxu0 0.0
    %192 = vmatmul.mubr.f32.gmra.mrb[0].mxu0 %v122
    %v193 = vpop.f32.mrb[0].mxu0
    %v194 = vadd.f32 0.0, %v193
    %v195 = vpop.f32.mrb[0].mxu0
    %v196 = vadd.f32 0.0, %v195
    %197 = vmatprep.mubr.f32.mxu0 0.0
    %198 = vmatmul.mubr.f32.gmra.mrb[0].mxu0 %v125
    %v199 = vpop.f32.mrb[0].mxu0
    %v200 = vadd.f32 0.0, %v199
    %v201 = vpop.f32.mrb[0].mxu0
    %v202 = vadd.f32 0.0, %v201
    %203 = vdwg.mxu0
    %204 = vst [vmem:[#allocation2] sm:$0xff] %v194
    %205 = vst [vmem:[#allocation2 + $0x8] sm:$0xff] %v196
    %206 = vst [vmem:[#allocation2 + $0x10] sm:$0xff] %v200
    %207 = vst [vmem:[#allocation2 + $0x18] sm:$0xff] %v202
    // Predicated region
    $region18: #{tpu_custom_call.1} parent=1 // pred_check
      _
    $region19: #{tpu_custom_call.1} parent=1 // pred_check_branch
      %209 = sbr.rel (0) target = $region21
    $region20: #{tpu_custom_call.1} parent=1 // pred_region
      %s211 = ssub.s32 512, 512
      %212 = vsyncadd [#allocation3], %s211
      %s213 = sshll.u32 [#allocation2], 4
      %s214 = int_to_ptr.vmem [resolvable:$true] %s213
      %219 = dma.vmem_to_hbm [thread:$0]  %s214, 512, %s4, [#allocation3], 256, 256, 16
    $region21: #{tpu_custom_call.1} parent=1 // pred_fallthru
      _
    // Predicated region
    $region22: #{tpu_custom_call.1} parent=1 // pred_check
      _
    $region23: #{tpu_custom_call.1} parent=1 // pred_check_branch
      %221 = sbr.rel (0) target = $region25
    $region24: #{tpu_custom_call.1} parent=1 // pred_region
      %222 = dma.done [#allocation3], 512
    $region25: #{tpu_custom_call.1} parent=1 // pred_fallthru
      _
    %223 = vsyncpa [#allocation3], 1

</llo_original>
